<compile_context>
chip_gen: v5e
topology: v5e:2x2
jax: 0.10.0
libtpu: 0.0.40
codegen_flags: <defaults>
</compile_context>

<pallas_src>
import functools

import jax
import jax.numpy as jnp
from jax.experimental import pallas as pl
from jax.experimental.pallas import tpu as pltpu


_LANE = 128
_VMEM_LIMIT = 32 * 1024 * 1024     # safe scoped-VMEM request on v5e/v6e/v7x


def _round_up(x, m):
    return ((x + m - 1) // m) * m


def _pick_lane_tile(l_pad, tm_max):
    """Largest multiple-of-128 divisor of l_pad that is <= tm_max, preferring
    tiles that leave >= 2 grid steps (v7x megacore sharding of the lane axis)."""
    divs = [t for t in range(_LANE, min(l_pad, tm_max) + 1, _LANE)
            if l_pad % t == 0]
    multi = [t for t in divs if l_pad // t >= 2]
    if multi:
        return max(multi)
    return max(divs) if divs else _LANE


# ----------------------------------------------------------------------------
# Kernel 1: fused per-neighbor shared-MLP chain + max-over-neighbors pooling.
# ----------------------------------------------------------------------------
def _mlp_pool_kernel(*args, n_layers, has_pre):
    """args = (x_ref, [pre_ref,] w0, b0, ..., w{L-1}, b{L-1}, o_ref).

    x_ref  : (Cin, TL)  slab for neighbor ki of the current lane tile.
    pre_ref: (C0,  TL)  optional k-invariant layer-0 pre-activation term.
    wi     : (Cout_i, Cin_i) pre-transposed weight; bi: (Cout_i, 1).
    o_ref  : (Cout, TL) resident output block, max-accumulated over the K grid
             axis; written back to HBM only when the lane tile changes.
    """
    x_ref = args[0]
    off = 2 if has_pre else 1
    pre_ref = args[1] if has_pre else None
    wb = args[off:off + 2 * n_layers]
    o_ref = args[off + 2 * n_layers]

    ki = pl.program_id(1)

    h = x_ref[...]
    for i in range(n_layers):
        h = (jnp.dot(wb[2 * i][...], h, preferred_element_type=jnp.float32)
             + wb[2 * i + 1][...])
        if i == 0 and has_pre:
            h = h + pre_ref[...]
        h = jnp.maximum(h, 0.0)

    @pl.when(ki == 0)
    def _():
        o_ref[...] = h

    @pl.when(ki > 0)
    def _():
        o_ref[...] = jnp.maximum(o_ref[...], h)


def pooled_mlp_forward(x_kcl, weights, biases, pre=None, *, tm_max=4096):
    """relu-MLP chain applied per neighbor, max-pooled over neighbors.

    x_kcl : (K, Cin, L) f32 — neighbor-major, channels on sublanes, points on
            lanes (L = B*N, ideally pre-padded to a multiple of 128).
    weights[i]: (Cin_i, Cout_i); biases[i]: (Cout_i,).
    pre   : optional (Cout_0, L) per-point term added to the layer-0
            pre-activation (k-invariant half of a split first layer).
    Returns (Cout_last, L) = max_k MLP(x[k]).
    """
    k, c_in, l = (int(s) for s in x_kcl.shape)
    n_layers = len(weights)
    c_out = int(weights[-1].shape[1])
    c0 = int(weights[0].shape[1])

    l_pad = _round_up(l, _LANE)
    if l_pad != l:
        x_kcl = jnp.pad(x_kcl, ((0, 0), (0, 0), (0, l_pad - l)))
        if pre is not None:
            pre = jnp.pad(pre, ((0, 0), (0, l_pad - l)))
    tl = _pick_lane_tile(l_pad, tm_max)

    args = [x_kcl]
    in_specs = [pl.BlockSpec((None, c_in, tl), lambda li, ki: (ki, 0, li))]
    if pre is not None:
        args.append(pre)
        in_specs.append(pl.BlockSpec((c0, tl), lambda li, ki: (0, li)))
    for w, b in zip(weights, biases):
        ci, co = int(w.shape[0]), int(w.shape[1])
        args.append(jnp.asarray(w).T)                       # (Cout, Cin)
        in_specs.append(pl.BlockSpec((co, ci), lambda li, ki: (0, 0)))
        args.append(jnp.asarray(b).reshape(co, 1))
        in_specs.append(pl.BlockSpec((co, 1), lambda li, ki: (0, 0)))

    flops = 2 * k * l_pad * sum(int(w.shape[0]) * int(w.shape[1])
                                for w in weights)
    bytes_accessed = 4 * (k * c_in * l_pad + c_out * l_pad
                          + (c0 * l_pad if pre is not None else 0)
                          + sum(int(w.size) + int(b.size)
                                for w, b in zip(weights, biases)))

    out = pl.pallas_call(
        functools.partial(_mlp_pool_kernel, n_layers=n_layers,
                          has_pre=pre is not None),
        out_shape=jax.ShapeDtypeStruct((c_out, l_pad), jnp.float32),
        grid=(l_pad // tl, k),
        in_specs=in_specs,
        out_specs=pl.BlockSpec((c_out, tl), lambda li, ki: (0, li)),
        compiler_params=pltpu.CompilerParams(
            dimension_semantics=("parallel", "arbitrary"),
            vmem_limit_bytes=_VMEM_LIMIT),
        cost_estimate=pl.CostEstimate(flops=flops, transcendentals=0,
                                      bytes_accessed=bytes_accessed),
    )(*args)

    return out if l_pad == l else out[:, :l]


# ----------------------------------------------------------------------------
# Kernel 2: fused global + msf head, plus the k-invariant half of fu layer 0.
# ----------------------------------------------------------------------------
def _global_head_kernel(*args, n_global, n_msf):
    """args = (x_ref, wg0,bg0,...,wm0,bm0,..., wfu_g, msf_ref, fupre_ref).

    pointwise_global is computed and consumed entirely in VMEM; outputs are
    msf and the k-invariant fu layer-0 term W_g @ pointwise_global (no bias).
    """
    x_ref = args[0]
    wbg = args[1:1 + 2 * n_global]
    wbm = args[1 + 2 * n_global:1 + 2 * (n_global + n_msf)]
    wfu_g_ref = args[1 + 2 * (n_global + n_msf)]
    msf_ref, fupre_ref = args[-2], args[-1]

    g = x_ref[...]
    for i in range(n_global):
        g = jnp.maximum(
            jnp.dot(wbg[2 * i][...], g, preferred_element_type=jnp.float32)
            + wbg[2 * i + 1][...], 0.0)

    fupre_ref[...] = jnp.dot(wfu_g_ref[...], g,
                             preferred_element_type=jnp.float32)

    m = g
    for i in range(n_msf):
        m = jnp.maximum(
            jnp.dot(wbm[2 * i][...], m, preferred_element_type=jnp.float32)
            + wbm[2 * i + 1][...], 0.0)
    msf_ref[...] = m


def global_head_forward(point_cl, global_wb, msf_wb, w_fu_global, *,
                        tm_max=4096):
    """point_cl: (Cin, L).  Returns (msf (Cm, L), fu_pre (Cfu0, L))."""
    c_in, l = (int(s) for s in point_cl.shape)
    gw, gb = global_wb
    mw, mb = msf_wb
    n_global, n_msf = len(gw), len(mw)
    cg = int(gw[-1].shape[1])
    cm = int(mw[-1].shape[1])
    cfu0 = int(w_fu_global.shape[1])

    l_pad = _round_up(l, _LANE)
    if l_pad != l:
        point_cl = jnp.pad(point_cl, ((0, 0), (0, l_pad - l)))
    tl = _pick_lane_tile(l_pad, tm_max)

    args = [point_cl]
    in_specs = [pl.BlockSpec((c_in, tl), lambda li: (0, li))]
    for w, b in list(zip(gw, gb)) + list(zip(mw, mb)):
        ci, co = int(w.shape[0]), int(w.shape[1])
        args.append(jnp.asarray(w).T)
        in_specs.append(pl.BlockSpec((co, ci), lambda li: (0, 0)))
        args.append(jnp.asarray(b).reshape(co, 1))
        in_specs.append(pl.BlockSpec((co, 1), lambda li: (0, 0)))
    args.append(jnp.asarray(w_fu_global).T)                 # (Cfu0, Cg)
    in_specs.append(pl.BlockSpec((cfu0, cg), lambda li: (0, 0)))

    flops = 2 * l_pad * (sum(int(w.shape[0]) * int(w.shape[1])
                             for w in list(gw) + list(mw))
                         + int(w_fu_global.size))
    bytes_accessed = 4 * (c_in + cm + cfu0) * l_pad

    msf, fu_pre = pl.pallas_call(
        functools.partial(_global_head_kernel, n_global=n_global,
                          n_msf=n_msf),
        out_shape=(jax.ShapeDtypeStruct((cm, l_pad), jnp.float32),
                   jax.ShapeDtypeStruct((cfu0, l_pad), jnp.float32)),
        grid=(l_pad // tl,),
        in_specs=in_specs,
        out_specs=(pl.BlockSpec((cm, tl), lambda li: (0, li)),
                   pl.BlockSpec((cfu0, tl), lambda li: (0, li))),
        compiler_params=pltpu.CompilerParams(
            dimension_semantics=("parallel",),
            vmem_limit_bytes=_VMEM_LIMIT),
        cost_estimate=pl.CostEstimate(flops=flops, transcendentals=0,
                                      bytes_accessed=bytes_accessed),
    )(*args)

    if l_pad != l:
        msf, fu_pre = msf[:, :l], fu_pre[:, :l]
    return msf, fu_pre


# ----------------------------------------------------------------------------
# KNN grouping (plain JAX: data-dependent top_k + gather).
# ----------------------------------------------------------------------------
def knn_indices(queries, candidates, k):
    """queries: (B, S, D), candidates: (B, N, D) -> (B, S, k) neighbor ids."""
    d2 = (jnp.sum(queries * queries, axis=-1, keepdims=True)
          - 2.0 * jnp.einsum("bsd,bnd->bsn", queries, candidates,
                             precision=jax.lax.Precision.HIGHEST)
          + jnp.sum(candidates * candidates, axis=-1)[:, None, :])
    _, idx = jax.lax.top_k(-d2, k)
    return idx


# TODO(synk): the original sample_and_group_knn relies on undefined
# knn_indices_func_{cpu,gpu} and its per-batch indexing is shape-ambiguous;
# this is the standard "gather k nearest neighbours, channels-first" reading.
# The top_k + gather is data dependent and stays in plain JAX.
def group_knn_kcl(xyz, points, k, use_xyz=False):
    """xyz: (B, S, D) queries, points: (B, N, C) candidates.
    Returns grouped features laid out (K, C[+D], B*S): neighbor-major,
    channels on sublanes, points on lanes (the pooled-MLP kernel layout)."""
    idx = knn_indices(xyz, points, k)                       # (B, S, k)
    grouped = jax.vmap(lambda p, i: p[i])(points, idx)      # (B, S, k, C)
    if use_xyz:
        b, s, d = xyz.shape
        centers = jnp.broadcast_to(xyz[:, :, None, :], (b, s, k, d))
        grouped = jnp.concatenate([centers, grouped], axis=-1)
    b, s, kk, c = grouped.shape
    return jnp.transpose(grouped, (2, 3, 0, 1)).reshape(kk, c, b * s)


# ----------------------------------------------------------------------------
# LMFEAM forward (Pallas path).
# ----------------------------------------------------------------------------
def lmfeam_forward(x, params, *, nsample, point_scale=None, tm_max=4096):
    """x: (B, N, 3).  Returns (maxed_feature (B, Cf, N), msf (B, Cm, N))."""
    del point_scale                         # knn grouping ignores the radius
    b, n, _ = (int(s) for s in x.shape)
    l = b * n
    l_pad = _round_up(l, _LANE)

    def pad_lanes(a):
        if int(a.shape[-1]) == l_pad:
            return a
        cfg = [(0, 0)] * (a.ndim - 1) + [(0, l_pad - int(a.shape[-1]))]
        return jnp.pad(a, cfg)

    # Multi-scale grouping -> (K, 2*3, B*N) neighbor-major slabs, padded once.
    p0 = pad_lanes(group_knn_kcl(x, x, 8, use_xyz=True))
    p1 = pad_lanes(group_knn_kcl(x, x, 16, use_xyz=True))
    p2 = pad_lanes(group_knn_kcl(x, x, nsample, use_xyz=True))

    # Fused shared-MLP + max-over-neighbors (never materializes (B,C,N,K)).
    f0 = pooled_mlp_forward(p0, *params["scale0"], tm_max=tm_max)
    f1 = pooled_mlp_forward(p1, *params["scale1"], tm_max=tm_max)
    f2 = pooled_mlp_forward(p2, *params["scale2"], tm_max=tm_max)
    point = jnp.concatenate([f0, f1, f2], axis=0)            # (3*Cms, L_pad)

    # fu layer-0 split: rows [:Cg] act on pointwise_global (k-invariant),
    # rows [Cg:] act on the grouped msf features (per-neighbor).
    fu_w, fu_b = params["fu"]
    cg = int(params["global"][0][-1].shape[1])
    w_fu0_global = fu_w[0][:cg, :]
    w_fu0_msf = fu_w[0][cg:, :]

    # Fused global + msf head; pointwise_global never leaves VMEM, and the
    # k-invariant half of fu layer 0 is emitted instead of global_repeated.
    msf_pad, fu_pre = global_head_forward(point, params["global"],
                                          params["msf"], w_fu0_global,
                                          tm_max=tm_max)

    # Re-group msf by knn (plain JAX) and run the fused fu MLP + max pool.
    cm = int(msf_pad.shape[0])
    msf_pts = jnp.transpose(msf_pad[:, :l].reshape(cm, b, n), (1, 2, 0))
    msf_grouped = pad_lanes(group_knn_kcl(msf_pts, msf_pts, nsample,
                                          use_xyz=False))
    maxed = pooled_mlp_forward(msf_grouped,
                               [w_fu0_msf] + list(fu_w[1:]), list(fu_b),
                               pre=fu_pre, tm_max=tm_max)     # (Cf, L_pad)

    cf = int(maxed.shape[0])
    maxed_out = jnp.transpose(maxed[:, :l].reshape(cf, b, n), (1, 0, 2))
    msf_out = jnp.transpose(msf_pad[:, :l].reshape(cm, b, n), (1, 0, 2))
    return maxed_out, msf_out


# ----------------------------------------------------------------------------
# Pure-JAX references.
# ----------------------------------------------------------------------------
def pooled_mlp_reference(x_kcl, weights, biases, pre=None):
    h = x_kcl
    for i, (w, bias) in enumerate(zip(weights, biases)):
        h = jnp.einsum("cd,kcl->kdl", w, h,
                       precision=jax.lax.Precision.HIGHEST) + bias[None, :, None]
        if i == 0 and pre is not None:
            h = h + pre[None, :, :]
        h = jnp.maximum(h, 0.0)
    return jnp.max(h, axis=0)


def _mlp_chain_reference(x_bcm, weights, biases):
    h = x_bcm
    for w, bias in zip(weights, biases):
        h = jnp.einsum("cd,bcm->bdm", w, h,
                       precision=jax.lax.Precision.HIGHEST) + bias[None, :, None]
        h = jnp.maximum(h, 0.0)
    return h


def _group_knn_bcsk(xyz, points, k, use_xyz=False):
    idx = knn_indices(xyz, points, k)
    grouped = jax.vmap(lambda p, i: p[i])(points, idx)      # (B, S, k, C)
    if use_xyz:
        b, s, d = xyz.shape
        centers = jnp.broadcast_to(xyz[:, :, None, :], (b, s, k, d))
        grouped = jnp.concatenate([centers, grouped], axis=-1)
    return jnp.transpose(grouped, (0, 3, 1, 2))             # (B, C, S, k)


def lmfeam_reference(x, params, *, nsample, point_scale=None):
    """Pure-JAX forward mirroring the original PyTorch dataflow."""
    del point_scale

    def mlp2d(t, wb):
        bb, c, s, k = t.shape
        return _mlp_chain_reference(t.reshape(bb, c, s * k),
                                    *wb).reshape(bb, -1, s, k)

    p0 = _group_knn_bcsk(x, x, 8, use_xyz=True)
    p1 = _group_knn_bcsk(x, x, 16, use_xyz=True)
    p2 = _group_knn_bcsk(x, x, nsample, use_xyz=True)
    f0 = jnp.max(mlp2d(p0, params["scale0"]), axis=-1)
    f1 = jnp.max(mlp2d(p1, params["scale1"]), axis=-1)
    f2 = jnp.max(mlp2d(p2, params["scale2"]), axis=-1)
    point = jnp.concatenate([f0, f1, f2], axis=1)

    pointwise_global = _mlp_chain_reference(point, *params["global"])
    msf = _mlp_chain_reference(pointwise_global, *params["msf"])

    msf_pts = jnp.transpose(msf, (0, 2, 1))
    msf_grouped = _group_knn_bcsk(msf_pts, msf_pts, nsample, use_xyz=False)
    global_repeated = jnp.broadcast_to(
        pointwise_global[..., None], pointwise_global.shape + (nsample,))
    contacted = jnp.concatenate([global_repeated, msf_grouped], axis=1)
    mixed = mlp2d(contacted, params["fu"])
    maxed = jnp.max(mixed, axis=-1)
    return maxed, msf


def init_params(key, channel_in, mlp_spec):
    """Deterministic init mimicking nn.Conv default (uniform fan-in bound)."""
    weights, biases = [], []
    pre = channel_in
    for layer in mlp_spec:
        key, kw, kb = jax.random.split(key, 3)
        bound = 1.0 / float(pre) ** 0.5
        weights.append(jax.random.uniform(kw, (pre, layer), jnp.float32,
                                          -bound, bound))
        biases.append(jax.random.uniform(kb, (layer,), jnp.float32,
                                         -bound, bound))
        pre = layer
    return weights, biases


if __name__ == "__main__":
    # Small LMFEAM config.
    mlp_multiscale = [32, 64]
    mlp_global = [128, 64]
    mlp_msf = [64, 32]
    mlp_fushion = [128, 64]
    nsample = 32
    point_scale = [0.1, 0.2, 0.4]    # unused by knn grouping (API parity)
    B, N, D = 2, 64, 3
    channel_in = 2 * D               # grouped point channels + centre xyz

    key = jax.random.PRNGKey(0)
    key, kx = jax.random.split(key)
    x = jax.random.normal(kx, (B, N, D), dtype=jnp.float32)

    names_specs = [
        ("scale0", channel_in, mlp_multiscale),
        ("scale1", channel_in, mlp_multiscale),
        ("scale2", channel_in, mlp_multiscale),
        ("global", 3 * mlp_multiscale[-1], mlp_global),
        ("msf", mlp_global[-1], mlp_msf),
        ("fu", mlp_global[-1] + mlp_msf[-1], mlp_fushion),
    ]
    params = {}
    for name, cin, spec in names_specs:
        key, sub = jax.random.split(key)
        params[name] = init_params(sub, cin, spec)

    # Unit check of the fused pooled-MLP kernel (odd lane count -> padding),
    # with and without the k-invariant pre-activation term.
    key, kt, kp = jax.random.split(key, 3)
    xt = jax.random.normal(kt, (8, channel_in, 300), dtype=jnp.float32)
    pre_t = jax.random.normal(kp, (mlp_multiscale[0], 300), dtype=jnp.float32)
    w0, b0 = params["scale0"]
    yk = jax.block_until_ready(pooled_mlp_forward(xt, w0, b0))
    yr = pooled_mlp_reference(xt, w0, b0)
    assert yk.shape == yr.shape
    assert jnp.allclose(yk, yr, atol=1e-4, rtol=1e-4), "pooled MLP mismatch"
    yk2 = jax.block_until_ready(pooled_mlp_forward(xt, w0, b0, pre=pre_t))
    yr2 = pooled_mlp_reference(xt, w0, b0, pre=pre_t)
    assert jnp.allclose(yk2, yr2, atol=1e-4, rtol=1e-4), "pre-term mismatch"

    # Full LMFEAM forward with Pallas kernels for every MLP stage.
    fwd = jax.jit(functools.partial(lmfeam_forward, nsample=nsample,
                                    point_scale=tuple(point_scale)))
    maxed, msf = fwd(x, params)
    maxed = jax.block_until_ready(maxed)
    msf = jax.block_until_ready(msf)

    # Pure-JAX end-to-end reference mirroring the original PyTorch module.
    maxed_ref, msf_ref = lmfeam_reference(x, params, nsample=nsample,
                                          point_scale=point_scale)

    assert maxed.shape == (B, mlp_fushion[-1], N)
    assert msf.shape == (B, mlp_msf[-1], N)
    assert jnp.allclose(msf, msf_ref, atol=1e-3, rtol=1e-3), "msf mismatch"
    assert jnp.allclose(maxed, maxed_ref, atol=1e-3, rtol=1e-3), "maxed mismatch"

    print("KERNEL_OK")
</pallas_src>

<mosaic_0001>
module attributes {stable_mosaic.version = 11 : i64} {
  func.func @_mlp_pool_kernel(%arg0: i32, %arg1: i32, %arg2: memref<1x6x128xf32, #tpu.memory_space<vmem>>, %arg3: memref<32x6xf32, #tpu.memory_space<vmem>>, %arg4: memref<32x1xf32, #tpu.memory_space<vmem>>, %arg5: memref<64x32xf32, #tpu.memory_space<vmem>>, %arg6: memref<64x1xf32, #tpu.memory_space<vmem>>, %arg7: memref<64x128xf32, #tpu.memory_space<vmem>>) attributes {dimension_semantics = [#tpu.dimension_semantics<parallel>, #tpu.dimension_semantics<arbitrary>], iteration_bounds = array<i64: 3, 8>, scalar_prefetch = 0 : i64, scratch_operands = 0 : i64, tpu.core_type = #tpu.core_type<tc>, window_params = [{transform_indices = @transform_0, window_bounds = array<i64: 1, 6, 128>}, {pipeline_mode = #tpu.pipeline_mode<synchronous>, transform_indices = @transform_1, window_bounds = array<i64: 32, 6>}, {pipeline_mode = #tpu.pipeline_mode<synchronous>, transform_indices = @transform_2, window_bounds = array<i64: 32, 1>}, {pipeline_mode = #tpu.pipeline_mode<synchronous>, transform_indices = @transform_3, window_bounds = array<i64: 64, 32>}, {pipeline_mode = #tpu.pipeline_mode<synchronous>, transform_indices = @transform_4, window_bounds = array<i64: 64, 1>}, {transform_indices = @transform_5, window_bounds = array<i64: 64, 128>}]} {
    %c0 = arith.constant 0 : index
    %c0_0 = arith.constant 0 : index
    %c0_1 = arith.constant 0 : index
    %0 = vector.load %arg2[%c0, %c0_0, %c0_1] : memref<1x6x128xf32, #tpu.memory_space<vmem>>, vector<1x6x128xf32>
    %1 = vector.shape_cast %0 : vector<1x6x128xf32> to vector<6x128xf32>
    %c0_2 = arith.constant 0 : index
    %c0_3 = arith.constant 0 : index
    %2 = vector.load %arg3[%c0_2, %c0_3] : memref<32x6xf32, #tpu.memory_space<vmem>>, vector<32x6xf32>
    %cst = arith.constant dense<0.000000e+00> : vector<32x128xf32>
    %3 = tpu.matmul %2, %1, %cst {dimension_numbers = #tpu.dot_dimension_numbers<[1], [0], [0], [1], [0, 0, 1, 1], [], []>} : vector<32x6xf32>, vector<6x128xf32>, vector<32x128xf32> -> vector<32x128xf32>
    %c0_4 = arith.constant 0 : index
    %c0_5 = arith.constant 0 : index
    %4 = vector.load %arg4[%c0_4, %c0_5] : memref<32x1xf32, #tpu.memory_space<vmem>>, vector<32x1xf32>
    %5 = vector.broadcast %4 : vector<32x1xf32> to vector<32x128xf32>
    %6 = arith.addf %3, %5 : vector<32x128xf32>
    %cst_6 = arith.constant 0.000000e+00 : f32
    %7 = vector.broadcast %cst_6 : f32 to vector<32x128xf32>
    %8 = arith.maximumf %6, %7 : vector<32x128xf32>
    %c0_7 = arith.constant 0 : index
    %c0_8 = arith.constant 0 : index
    %9 = vector.load %arg5[%c0_7, %c0_8] : memref<64x32xf32, #tpu.memory_space<vmem>>, vector<64x32xf32>
    %cst_9 = arith.constant dense<0.000000e+00> : vector<64x128xf32>
    %10 = tpu.matmul %9, %8, %cst_9 {dimension_numbers = #tpu.dot_dimension_numbers<[1], [0], [0], [1], [0, 0, 1, 1], [], []>} : vector<64x32xf32>, vector<32x128xf32>, vector<64x128xf32> -> vector<64x128xf32>
    %c0_10 = arith.constant 0 : index
    %c0_11 = arith.constant 0 : index
    %11 = vector.load %arg6[%c0_10, %c0_11] : memref<64x1xf32, #tpu.memory_space<vmem>>, vector<64x1xf32>
    %12 = vector.broadcast %11 : vector<64x1xf32> to vector<64x128xf32>
    %13 = arith.addf %10, %12 : vector<64x128xf32>
    %cst_12 = arith.constant 0.000000e+00 : f32
    %14 = vector.broadcast %cst_12 : f32 to vector<64x128xf32>
    %15 = arith.maximumf %13, %14 : vector<64x128xf32>
    %c0_i32 = arith.constant 0 : i32
    %16 = arith.cmpi eq, %arg1, %c0_i32 : i32
    %17 = arith.extui %16 : i1 to i32
    %c0_i32_13 = arith.constant 0 : i32
    %18 = arith.cmpi ne, %17, %c0_i32_13 : i32
    scf.if %18 {
      %c0_16 = arith.constant 0 : index
      %c0_17 = arith.constant 0 : index
      %22 = vector.load %arg7[%c0_16, %c0_17] : memref<64x128xf32, #tpu.memory_space<vmem>>, vector<64x128xf32>
      tpu.vector_store %arg7[%c0_16, %c0_17], %15 {strides = array<i32>} : memref<64x128xf32, #tpu.memory_space<vmem>>, vector<64x128xf32>,
    } else {
    }
    %c0_i32_14 = arith.constant 0 : i32
    %19 = arith.cmpi sgt, %arg1, %c0_i32_14 : i32
    %20 = arith.extui %19 : i1 to i32
    %c0_i32_15 = arith.constant 0 : i32
    %21 = arith.cmpi ne, %20, %c0_i32_15 : i32
    scf.if %21 {
      %c0_16 = arith.constant 0 : index
      %c0_17 = arith.constant 0 : index
      %22 = vector.load %arg7[%c0_16, %c0_17] : memref<64x128xf32, #tpu.memory_space<vmem>>, vector<64x128xf32>
      %23 = arith.maximumf %22, %15 : vector<64x128xf32>
      %c0_18 = arith.constant 0 : index
      %c0_19 = arith.constant 0 : index
      %24 = vector.load %arg7[%c0_18, %c0_19] : memref<64x128xf32, #tpu.memory_space<vmem>>, vector<64x128xf32>
      tpu.vector_store %arg7[%c0_18, %c0_19], %23 {strides = array<i32>} : memref<64x128xf32, #tpu.memory_space<vmem>>, vector<64x128xf32>,
    } else {
    }
    return
  }
  func.func @transform_0(%arg0: i32, %arg1: i32) -> (i32, i32, i32) {
    %c0_i32 = arith.constant 0 : i32
    %c0_i32_0 = arith.constant 0 : i32
    return %arg1, %c0_i32, %arg0 : i32, i32, i32
  }
  func.func @transform_1(%arg0: i32, %arg1: i32) -> (i32, i32) {
    %c0_i32 = arith.constant 0 : i32
    %c0_i32_0 = arith.constant 0 : i32
    %c0_i32_1 = arith.constant 0 : i32
    return %c0_i32, %c0_i32_0 : i32, i32
  }
  func.func @transform_2(%arg0: i32, %arg1: i32) -> (i32, i32) {
    %c0_i32 = arith.constant 0 : i32
    %c0_i32_0 = arith.constant 0 : i32
    %c0_i32_1 = arith.constant 0 : i32
    return %c0_i32, %c0_i32_0 : i32, i32
  }
  func.func @transform_3(%arg0: i32, %arg1: i32) -> (i32, i32) {
    %c0_i32 = arith.constant 0 : i32
    %c0_i32_0 = arith.constant 0 : i32
    %c0_i32_1 = arith.constant 0 : i32
    return %c0_i32, %c0_i32_0 : i32, i32
  }
  func.func @transform_4(%arg0: i32, %arg1: i32) -> (i32, i32) {
    %c0_i32 = arith.constant 0 : i32
    %c0_i32_0 = arith.constant 0 : i32
    %c0_i32_1 = arith.constant 0 : i32
    return %c0_i32, %c0_i32_0 : i32, i32
  }
  func.func @transform_5(%arg0: i32, %arg1: i32) -> (i32, i32) {
    %c0_i32 = arith.constant 0 : i32
    %c0_i32_0 = arith.constant 0 : i32
    return %c0_i32, %arg0 : i32, i32
  }
}

</mosaic_0001>

<llo_original>
// kernel: tpu_custom_call.1
$region0: #{tpu_custom_call.1}
  #allocation0 [shape = 'u32[]', space=smem, size = 0x4, offset = 0x4, fixed_abs, tag = 'smem constant byte address 0x4 - core index']
  #allocation1 [shape = 'u32[72,128]{1,0:T(1,128)}', space=vmem, size = 0x9000, scoped, tag = 'internal scratch']
  %s0 = inlined_call_operand.vmem [shape: f32[8,6,384], index: 0, kind: input, shape index: {}]
  %s1 = inlined_call_operand.vmem [shape: f32[32,6], index: 1, kind: input, shape index: {}]
  %s2 = inlined_call_operand.vmem [shape: f32[32,1], index: 2, kind: input, shape index: {}]
  %s3 = inlined_call_operand.vmem [shape: f32[64,32], index: 3, kind: input, shape index: {}]
  %s4 = inlined_call_operand.vmem [shape: f32[64,1], index: 4, kind: input, shape index: {}]
  %s5 = inlined_call_operand.hbm [shape: f32[64,384], index: 5, kind: output, shape index: {}]
  %s6 = sld [smem:[#allocation0]]
  $region61: #{tpu_custom_call.1} parent=0
    _
  %s8 = ssub.s32 1, %s6
  %s9 = scalar_select 0, %s8, %s6
  $region1: #{tpu_custom_call.1} parent=0
    #allocation2 [shape = 'u8[65536]{0}', space=vmem, size = 0x10000, scoped, tag = 'output window, operand 0']
    #allocation3 [shape = 's32[2]{0}', space=sflag, size = 0x8, scoped, tag = 'scoped memory for tpu_custom_call.1']
    %10 = vsyncpa [#allocation3], 0
    %s11 = scalar_lea.sflag [#allocation3], 1
    %12 = vsyncpa %s11, 0
    loop: start=0, step=1, limit=26
    $region2: #{tpu_custom_call.1} parent=1 // loop_pre_header
      _
    $region3: #{tpu_custom_call.1} parent=1 // loop_header
      %s14 = sphi 0, %s18
      %p15 = scmp.ge.s32.totalorder %s14, 26
      %s21 = sphi 0, %s33
      %s22 = sphi 0, %s29
      %s23 = sphi 0, %s21
      %s24 = sphi 0, %s22
      %s25 = sphi 0, %s23
      %s26 = sphi 0, %s24
      %s38 = sphi 0, %s40
      %s41 = sphi 0, %s38
      %s42 = sphi 0, %s41
      %s58 = sphi 0, %s42
      %s62 = sphi 0, %s62
      %s64 = sphi 0, %s62
      %s65 = sphi 0, %s64
      %s79 = sphi 0, %s65
      %s83 = sphi 0, %s83
      %s85 = sphi 0, %s83
      %s86 = sphi 0, %s85
      %s100 = sphi 0, %s86
      %s104 = sphi 0, %s104
      %s106 = sphi 0, %s104
      %s107 = sphi 0, %s106
      %s121 = sphi 0, %s107
      %s125 = sphi 0, %s125
      %s127 = sphi 0, %s125
      %s128 = sphi 0, %s127
      %s142 = sphi 0, %s128
      %s148 = sphi 0, %s150
      %s151 = sphi 0, %s148
      %s152 = sphi 0, %s151
      %s168 = sphi 0, %s152
    $region4: #{tpu_custom_call.1} parent=1 // loop_header_branch
      %17 = sbr.rel (%p15) target = $region8
    $region5: #{tpu_custom_call.1} parent=1 // loop_body
      %s19 = ssub.s32 %s14, 1
      %s20 = ssub.s32 %s14, 2
      %s27 = sadd.s32 1, %s22
      %p28 = scmp.ge.s32.totalorder %s27, 8
      %s29 = scalar_select %p28, 0, %s27
      %s30 = sadd.s32 1, %s21
      %s31 = scalar_select %p28, %s30, %s21
      %p32 = scmp.ge.s32.totalorder %s31, 3
      %s33 = scalar_select %p32, 0, %s31
      %s34 = ssub.s32 %s22, %s29
      %s35 = ssub.s32 %s21, %s33
      %s36 = sor.u32 %s34, %s35
      %p37 = scmp.eq.s32.totalorder %s36, 0
      %s39 = sadd.s32 %s38, 1
      %s40 = scalar_select %p37, %s38, %s39
      %p43 = pneg %p37
      %p44 = scmp.eq.s32.totalorder %s14, 23
      %p45 = por %p43, %p44
      %p46 = scmp.ne.s32.totalorder %s38, %s41
      %p47 = scmp.eq.s32.totalorder %s14, 0
      %p48 = por %p46, %p47
      %p49 = scmp.ne.s32.totalorder %s38, %s41
      %p50 = scmp.eq.s32.totalorder %s19, 23
      %p51 = por %p49, %p50
      %p52 = scmp.ne.s32.totalorder %s41, %s42
      %p53 = scmp.eq.s32.totalorder %s19, 0
      %p54 = por %p52, %p53
      %p55 = scmp.ne.s32.totalorder %s41, %s42
      %p56 = scmp.eq.s32.totalorder %s20, 23
      %p57 = por %p55, %p56
      %p59 = scmp.ne.s32.totalorder %s42, %s58
      %p60 = scmp.eq.s32.totalorder %s20, 0
      %p61 = por %p59, %p60
      %s63 = sadd.s32 %s62, 1
      %p66 = scmp.eq.s32.totalorder %s14, 23
      %p67 = scmp.ne.s32.totalorder %s62, %s64
      %p68 = scmp.eq.s32.totalorder %s14, 0
      %p69 = por %p67, %p68
      %p70 = scmp.ne.s32.totalorder %s62, %s64
      %p71 = scmp.eq.s32.totalorder %s19, 23
      %p72 = por %p70, %p71
      %p73 = scmp.ne.s32.totalorder %s64, %s65
      %p74 = scmp.eq.s32.totalorder %s19, 0
      %p75 = por %p73, %p74
      %p76 = scmp.ne.s32.totalorder %s64, %s65
      %p77 = scmp.eq.s32.totalorder %s20, 23
      %p78 = por %p76, %p77
      %p80 = scmp.ne.s32.totalorder %s65, %s79
      %p81 = scmp.eq.s32.totalorder %s20, 0
      %p82 = por %p80, %p81
      %s84 = sadd.s32 %s83, 1
      %p87 = scmp.eq.s32.totalorder %s14, 23
      %p88 = scmp.ne.s32.totalorder %s83, %s85
      %p89 = scmp.eq.s32.totalorder %s14, 0
      %p90 = por %p88, %p89
      %p91 = scmp.ne.s32.totalorder %s83, %s85
      %p92 = scmp.eq.s32.totalorder %s19, 23
      %p93 = por %p91, %p92
      %p94 = scmp.ne.s32.totalorder %s85, %s86
      %p95 = scmp.eq.s32.totalorder %s19, 0
      %p96 = por %p94, %p95
      %p97 = scmp.ne.s32.totalorder %s85, %s86
      %p98 = scmp.eq.s32.totalorder %s20, 23
      %p99 = por %p97, %p98
      %p101 = scmp.ne.s32.totalorder %s86, %s100
      %p102 = scmp.eq.s32.totalorder %s20, 0
      %p103 = por %p101, %p102
      %s105 = sadd.s32 %s104, 1
      %p108 = scmp.eq.s32.totalorder %s14, 23
      %p109 = scmp.ne.s32.totalorder %s104, %s106
      %p110 = scmp.eq.s32.totalorder %s14, 0
      %p111 = por %p109, %p110
      %p112 = scmp.ne.s32.totalorder %s104, %s106
      %p113 = scmp.eq.s32.totalorder %s19, 23
      %p114 = por %p112, %p113
      %p115 = scmp.ne.s32.totalorder %s106, %s107
      %p116 = scmp.eq.s32.totalorder %s19, 0
      %p117 = por %p115, %p116
      %p118 = scmp.ne.s32.totalorder %s106, %s107
      %p119 = scmp.eq.s32.totalorder %s20, 23
      %p120 = por %p118, %p119
      %p122 = scmp.ne.s32.totalorder %s107, %s121
      %p123 = scmp.eq.s32.totalorder %s20, 0
      %p124 = por %p122, %p123
      %s126 = sadd.s32 %s125, 1
      %p129 = scmp.eq.s32.totalorder %s14, 23
      %p130 = scmp.ne.s32.totalorder %s125, %s127
      %p131 = scmp.eq.s32.totalorder %s14, 0
      %p132 = por %p130, %p131
      %p133 = scmp.ne.s32.totalorder %s125, %s127
      %p134 = scmp.eq.s32.totalorder %s19, 23
      %p135 = por %p133, %p134
      %p136 = scmp.ne.s32.totalorder %s127, %s128
      %p137 = scmp.eq.s32.totalorder %s19, 0
      %p138 = por %p136, %p137
      %p139 = scmp.ne.s32.totalorder %s127, %s128
      %p140 = scmp.eq.s32.totalorder %s20, 23
      %p141 = por %p139, %p140
      %p143 = scmp.ne.s32.totalorder %s128, %s142
      %p144 = scmp.eq.s32.totalorder %s20, 0
      %p145 = por %p143, %p144
      %s146 = ssub.s32 %s21, %s33
      %p147 = scmp.eq.s32.totalorder %s146, 0
      %s149 = sadd.s32 %s148, 1
      %s150 = scalar_select %p147, %s148, %s149
      %p153 = pneg %p147
      %p154 = scmp.eq.s32.totalorder %s14, 23
      %p155 = por %p153, %p154
      %p156 = scmp.ne.s32.totalorder %s148, %s151
      %p157 = scmp.eq.s32.totalorder %s14, 0
      %p158 = por %p156, %p157
      %p159 = scmp.ne.s32.totalorder %s148, %s151
      %p160 = scmp.eq.s32.totalorder %s19, 23
      %p161 = por %p159, %p160
      %p162 = scmp.ne.s32.totalorder %s151, %s152
      %p163 = scmp.eq.s32.totalorder %s19, 0
      %p164 = por %p162, %p163
      %p165 = scmp.ne.s32.totalorder %s151, %s152
      %p166 = scmp.eq.s32.totalorder %s20, 23
      %p167 = por %p165, %p166
      %p169 = scmp.ne.s32.totalorder %s152, %s168
      %p170 = scmp.eq.s32.totalorder %s20, 0
      %p171 = por %p169, %p170
      %p172 = scmp.le.s32.totalorder 1, %s14
      %p173 = scmp.lt.s32.totalorder %s14, 25
      %p174 = pnand %p172, %p173
      %p175 = pneg %p174
      // Predicated region
      $region9: #{tpu_custom_call.1} parent=5 // pred_check
        _
      $region10: #{tpu_custom_call.1} parent=5 // pred_check_branch
        %177 = sbr.rel (%p174) target = $region12
      $region11: #{tpu_custom_call.1} parent=5 // pred_region
        %s178 = ssub.s32 %s14, 1
        // Predicated region
        $region13: #{tpu_custom_call.1} parent=11 // pred_check
          %p179 = pneg %p75
        $region14: #{tpu_custom_call.1} parent=11 // pred_check_branch
          %181 = sbr.rel (%p179) target = $region16
        $region15: #{tpu_custom_call.1} parent=11 // pred_region
          _
        $region16: #{tpu_custom_call.1} parent=11 // pred_fallthru
          _
        // Predicated region
        $region17: #{tpu_custom_call.1} parent=11 // pred_check
          %p182 = pneg %p96
        $region18: #{tpu_custom_call.1} parent=11 // pred_check_branch
          %184 = sbr.rel (%p182) target = $region20
        $region19: #{tpu_custom_call.1} parent=11 // pred_region
          _
        $region20: #{tpu_custom_call.1} parent=11 // pred_fallthru
          _
        // Predicated region
        $region21: #{tpu_custom_call.1} parent=11 // pred_check
          %p185 = pneg %p117
        $region22: #{tpu_custom_call.1} parent=11 // pred_check_branch
          %187 = sbr.rel (%p185) target = $region24
        $region23: #{tpu_custom_call.1} parent=11 // pred_region
          _
        $region24: #{tpu_custom_call.1} parent=11 // pred_fallthru
          _
        // Predicated region
        $region25: #{tpu_custom_call.1} parent=11 // pred_check
          %p188 = pneg %p138
        $region26: #{tpu_custom_call.1} parent=11 // pred_check_branch
          %190 = sbr.rel (%p188) target = $region28
        $region27: #{tpu_custom_call.1} parent=11 // pred_region
          _
        $region28: #{tpu_custom_call.1} parent=11 // pred_fallthru
          _
      $region12: #{tpu_custom_call.1} parent=5 // pred_fallthru
        _
      %p191 = scmp.lt.s32.totalorder %s14, 24
      // Predicated region
      $region29: #{tpu_custom_call.1} parent=5 // pred_check
        %p192 = pneg %p191
      $region30: #{tpu_custom_call.1} parent=5 // pred_check_branch
        %194 = sbr.rel (%p192) target = $region32
      $region31: #{tpu_custom_call.1} parent=5 // pred_region
        // Predicated region
        $region33: #{tpu_custom_call.1} parent=31 // pred_check
          %p195 = pneg %p48
        $region34: #{tpu_custom_call.1} parent=31 // pred_check_branch
          %197 = sbr.rel (%p195) target = $region36
        $region35: #{tpu_custom_call.1} parent=31 // pred_region
          %p198 = scmp.lt.s32.totalorder %s22, 7
          %s199 = scalar_select %p198, %s22, 7
          %p200 = scmp.lt.s32.totalorder %s21, 2
          %s201 = scalar_select %p200, %s21, 2
          %s202 = smul.addr %s199, 3
          %s203 = sadd.s32 %s201, %s202
          %s204 = smul.addr %s203, 8
          %s205 = scalar_lea.vmem %s0, %s204
        $region36: #{tpu_custom_call.1} parent=31 // pred_fallthru
          _
      $region32: #{tpu_custom_call.1} parent=5 // pred_fallthru
        _
      %p206 = scmp.le.s32.totalorder 1, %s14
      %p207 = scmp.lt.s32.totalorder %s14, 25
      %p208 = pnand %p206, %p207
      %p209 = pneg %p208
      // Predicated region
      $region37: #{tpu_custom_call.1} parent=5 // pred_check
        _
      $region38: #{tpu_custom_call.1} parent=5 // pred_check_branch
        %211 = sbr.rel (%p208) target = $region40
      $region39: #{tpu_custom_call.1} parent=5 // pred_region
        %s212 = ssub.s32 %s14, 1
        %p213 = scmp.lt.s32.totalorder %s24, 7
        %s214 = scalar_select %p213, %s24, 7
        %p215 = scmp.lt.s32.totalorder %s23, 2
        %s216 = scalar_select %p215, %s23, 2
        %s217 = smul.addr %s214, 3
        %s218 = sadd.s32 %s216, %s217
        %s219 = smul.addr %s218, 8
        %s220 = scalar_lea.vmem %s0, %s219
        %p221 = pneg %p54
        %p222 = pneg %p51
        %p223 = pneg %p75
        %p224 = pneg %p72
        %p225 = pneg %p96
        %p226 = pneg %p93
        %p227 = pneg %p117
        %p228 = pneg %p114
        %p229 = pneg %p138
        %p230 = pneg %p135
        %p231 = pneg %p164
        %p232 = pneg %p161
        %s233 = sand.u32 %s151, 1
        %s234 = scalar_lea.sflag [#allocation3], %s233
        %s235 = sand.u32 %s151, 1
        %s236 = smul.addr %s235, 64
        %s237 = scalar_lea.vmem [#allocation2], %s236
        %p238 = scmp.lt.s32.totalorder %s24, 7
        %s239 = scalar_select %p238, %s24, 7
        %p240 = scmp.lt.s32.totalorder %s23, 2
        %s241 = scalar_select %p240, %s23, 2
        %s242 = smul.addr %s239, 3
        %s243 = sadd.s32 %s241, %s242
        %s244 = smul.addr %s243, 8
        %s245 = scalar_lea.vmem %s0, %s244
        %v246 = vld [vmem:[%s245] sm:$0x3f]
        %v247 = vld [vmem:[%s1] sm:$0xff]
        %v248 = vld [vmem:[%s1 + $0x8] sm:$0xff]
        %v249 = vld [vmem:[%s1 + $0x10] sm:$0xff]
        %v250 = vld [vmem:[%s1 + $0x18] sm:$0xff]
        %v251 = vld [vmem:[%s2] sm:$0xff]
        %v252 = vld [vmem:[%s2 + $0x8] sm:$0xff]
        %v253 = vld [vmem:[%s2 + $0x10] sm:$0xff]
        %v254 = vld [vmem:[%s2 + $0x18] sm:$0xff]
        %256 = vset.pattern.permute.xlu0 0
        %257 = vperm.xlu0 %256, %v251
        %v258 = vpop.permute.xlu0 %257
        %261 = vset.pattern.permute.xlu0 0
        %262 = vperm.xlu0 %261, %v252
        %v263 = vpop.permute.xlu0 %262
        %266 = vset.pattern.permute.xlu0 0
        %267 = vperm.xlu0 %266, %v253
        %v268 = vpop.permute.xlu0 %267
        %271 = vset.pattern.permute.xlu0 0
        %272 = vperm.xlu0 %271, %v254
        %v273 = vpop.permute.xlu0 %272
        %vm275 = vcmask 48128
        %v277 = vsel %vm275, %v247, 0
        %v280 = vsel %vm275, %v248, 0
        %v283 = vsel %vm275, %v249, 0
        %v286 = vsel %vm275, %v250, 0
        %vm288 = vcmask 1045504
        %v290 = vsel %vm288, %v246, 0
        %292 = vmatpush.msra.mxu0 0.0
        %293 = vmatpush.msra.mxu0 0.0
        %294 = vmatpush.msra.mxu0 0.0
        %295 = vmatpush.msra.mxu0 0.0
        %296 = vmatpush.msra.mxu0 0.0
        %297 = vmatpush.msra.mxu0 0.0
        %298 = vmatpush.msra.mxu0 0.0
        %299 = vmatpush.msra.mxu0 0.0
        %300 = vmatpush.msra.mxu0 0.0
        %301 = vmatpush.msra.mxu0 0.0
        %302 = vmatpush.msra.mxu0 0.0
        %303 = vmatpush.msra.mxu0 0.0
        %304 = vmatpush.msra.mxu0 0.0
        %305 = vmatpush.msra.mxu0 0.0
        %306 = vmatpush.msra.mxu0 0.0
        %307 = vmatpush.msra.mxu0 %v290
        %308 = vmatmul.f32.gmra.mxu0 %v277
        %v309 = vpop.f32.mrf.mxu0
        %v310 = vadd.f32 %v258, %v309
        %311 = vmatmul.f32.gmra.mxu0 %v280
        %v312 = vpop.f32.mrf.mxu0
        %v313 = vadd.f32 %v263, %v312
        %314 = vmatmul.f32.gmra.mxu0 %v283
        %v315 = vpop.f32.mrf.mxu0
        %v316 = vadd.f32 %v268, %v315
        %317 = vmatmul.f32.gmra.mxu0 %v286
        %v318 = vpop.f32.mrf.mxu0
        %v319 = vadd.f32 %v273, %v318
        %320 = vdwg.mxu0
        %v321 = vmax.f32 %v310, 0.0
        %v322 = vmax.f32 %v313, 0.0
        %v323 = vmax.f32 %v316, 0.0
        %v324 = vmax.f32 %v319, 0.0
        %v325 = vld [vmem:[%s3] sm:$0xff]
        %v326 = vld [vmem:[%s3 + $0x8] sm:$0xff]
        %v327 = vld [vmem:[%s3 + $0x10] sm:$0xff]
        %v328 = vld [vmem:[%s3 + $0x18] sm:$0xff]
        %v329 = vld [vmem:[%s3 + $0x20] sm:$0xff]
        %v330 = vld [vmem:[%s3 + $0x28] sm:$0xff]
        %v331 = vld [vmem:[%s3 + $0x30] sm:$0xff]
        %v332 = vld [vmem:[%s3 + $0x38] sm:$0xff]
        %v333 = vld [vmem:[%s4] sm:$0xff]
        %v334 = vld [vmem:[%s4 + $0x8] sm:$0xff]
        %v335 = vld [vmem:[%s4 + $0x10] sm:$0xff]
        %v336 = vld [vmem:[%s4 + $0x18] sm:$0xff]
        %v337 = vld [vmem:[%s4 + $0x20] sm:$0xff]
        %v338 = vld [vmem:[%s4 + $0x28] sm:$0xff]
        %v339 = vld [vmem:[%s4 + $0x30] sm:$0xff]
        %v340 = vld [vmem:[%s4 + $0x38] sm:$0xff]
        %342 = vset.pattern.permute.xlu0 0
        %343 = vperm.xlu0 %342, %v333
        %v344 = vpop.permute.xlu0 %343
        %347 = vset.pattern.permute.xlu0 0
        %348 = vperm.xlu0 %347, %v334
        %v349 = vpop.permute.xlu0 %348
        %352 = vset.pattern.permute.xlu0 0
        %353 = vperm.xlu0 %352, %v335
        %v354 = vpop.permute.xlu0 %353
        %357 = vset.pattern.permute.xlu0 0
        %358 = vperm.xlu0 %357, %v336
        %v359 = vpop.permute.xlu0 %358
        %362 = vset.pattern.permute.xlu0 0
        %363 = vperm.xlu0 %362, %v337
        %v364 = vpop.permute.xlu0 %363
        %367 = vset.pattern.permute.xlu0 0
        %368 = vperm.xlu0 %367, %v338
        %v369 = vpop.permute.xlu0 %368
        %372 = vset.pattern.permute.xlu0 0
        %373 = vperm.xlu0 %372, %v339
        %v374 = vpop.permute.xlu0 %373
        %377 = vset.pattern.permute.xlu0 0
        %378 = vperm.xlu0 %377, %v340
        %v379 = vpop.permute.xlu0 %378
        %vm381 = vcmask 261120
        %v383 = vsel %vm381, %v325, 0
        %v386 = vsel %vm381, %v326, 0
        %v389 = vsel %vm381, %v327, 0
        %v392 = vsel %vm381, %v328, 0
        %v395 = vsel %vm381, %v329, 0
        %v398 = vsel %vm381, %v330, 0
        %v401 = vsel %vm381, %v331, 0
        %v404 = vsel %vm381, %v332, 0
        %406 = vmatpush.msra.mxu0 0.0
        %407 = vmatpush.msra.mxu0 0.0
        %408 = vmatpush.msra.mxu0 0.0
        %409 = vmatpush.msra.mxu0 0.0
        %410 = vmatpush.msra.mxu0 0.0
        %411 = vmatpush.msra.mxu0 0.0
        %412 = vmatpush.msra.mxu0 0.0
        %413 = vmatpush.msra.mxu0 0.0
        %414 = vmatpush.msra.mxu0 0.0
        %415 = vmatpush.msra.mxu0 0.0
        %416 = vmatpush.msra.mxu0 0.0
        %417 = vmatpush.msra.mxu0 0.0
        %418 = vmatpush.msra.mxu0 %v324
        %419 = vmatpush.msra.mxu0 %v323
        %420 = vmatpush.msra.mxu0 %v322
        %421 = vmatpush.msra.mxu0 %v321
        %422 = vmatmul.f32.gmra.mxu0 %v383
        %v423 = vpop.f32.mrf.mxu0
        %v424 = vadd.f32 %v344, %v423
        %425 = vmatmul.f32.gmra.mxu0 %v386
        %v426 = vpop.f32.mrf.mxu0
        %v427 = vadd.f32 %v349, %v426
        %428 = vmatmul.f32.gmra.mxu0 %v389
        %v429 = vpop.f32.mrf.mxu0
        %v430 = vadd.f32 %v354, %v429
        %431 = vmatmul.f32.gmra.mxu0 %v392
        %v432 = vpop.f32.mrf.mxu0
        %v433 = vadd.f32 %v359, %v432
        %434 = vmatmul.f32.gmra.mxu0 %v395
        %v435 = vpop.f32.mrf.mxu0
        %v436 = vadd.f32 %v364, %v435
        %437 = vmatmul.f32.gmra.mxu0 %v398
        %v438 = vpop.f32.mrf.mxu0
        %v439 = vadd.f32 %v369, %v438
        %440 = vmatmul.f32.gmra.mxu0 %v401
        %v441 = vpop.f32.mrf.mxu0
        %v442 = vadd.f32 %v374, %v441
        %443 = vmatmul.f32.gmra.mxu0 %v404
        %v444 = vpop.f32.mrf.mxu0
        %v445 = vadd.f32 %v379, %v444
        %446 = vdwg.mxu0
        %v447 = vmax.f32 %v424, 0.0
        %v448 = vmax.f32 %v427, 0.0
        %v449 = vmax.f32 %v430, 0.0
        %v450 = vmax.f32 %v433, 0.0
        %v451 = vmax.f32 %v436, 0.0
        %v452 = vmax.f32 %v439, 0.0
        %v453 = vmax.f32 %v442, 0.0
        %v454 = vmax.f32 %v445, 0.0
        %p455 = scmp.eq.s32.totalorder %s24, 0
        // Predicated region
        $region41: #{tpu_custom_call.1} parent=39 // pred_check
          %p456 = pneg %p455
        $region42: #{tpu_custom_call.1} parent=39 // pred_check_branch
          %458 = sbr.rel (%p456) target = $region44
        $region43: #{tpu_custom_call.1} parent=39 // pred_region
          %459 = vst [vmem:[%s237] sm:$0xff] %v447
          %460 = vst [vmem:[%s237 + $0x8] sm:$0xff] %v448
          %461 = vst [vmem:[%s237 + $0x10] sm:$0xff] %v449
          %462 = vst [vmem:[%s237 + $0x18] sm:$0xff] %v450
          %463 = vst [vmem:[%s237 + $0x20] sm:$0xff] %v451
          %464 = vst [vmem:[%s237 + $0x28] sm:$0xff] %v452
          %465 = vst [vmem:[%s237 + $0x30] sm:$0xff] %v453
          %466 = vst [vmem:[%s237 + $0x38] sm:$0xff] %v454
        $region44: #{tpu_custom_call.1} parent=39 // pred_fallthru
          _
        %p467 = scmp.gt.s32.totalorder %s24, 0
        // Predicated region
        $region45: #{tpu_custom_call.1} parent=39 // pred_check
          %p468 = pneg %p467
        $region46: #{tpu_custom_call.1} parent=39 // pred_check_branch
          %470 = sbr.rel (%p468) target = $region48
        $region47: #{tpu_custom_call.1} parent=39 // pred_region
          %v471 = vld [vmem:[%s237] sm:$0xff]
          %v472 = vld [vmem:[%s237 + $0x8] sm:$0xff]
          %v473 = vld [vmem:[%s237 + $0x10] sm:$0xff]
          %v474 = vld [vmem:[%s237 + $0x18] sm:$0xff]
          %v475 = vld [vmem:[%s237 + $0x20] sm:$0xff]
          %v476 = vld [vmem:[%s237 + $0x28] sm:$0xff]
          %v477 = vld [vmem:[%s237 + $0x30] sm:$0xff]
          %v478 = vld [vmem:[%s237 + $0x38] sm:$0xff]
          %v479 = vmax.f32 %v471, %v447
          %v480 = vmax.f32 %v472, %v448
          %v481 = vmax.f32 %v473, %v449
          %v482 = vmax.f32 %v474, %v450
          %v483 = vmax.f32 %v475, %v451
          %v484 = vmax.f32 %v476, %v452
          %v485 = vmax.f32 %v477, %v453
          %v486 = vmax.f32 %v478, %v454
          %487 = vst [vmem:[%s237] sm:$0xff] %v479
          %488 = vst [vmem:[%s237 + $0x8] sm:$0xff] %v480
          %489 = vst [vmem:[%s237 + $0x10] sm:$0xff] %v481
          %490 = vst [vmem:[%s237 + $0x18] sm:$0xff] %v482
          %491 = vst [vmem:[%s237 + $0x20] sm:$0xff] %v483
          %492 = vst [vmem:[%s237 + $0x28] sm:$0xff] %v484
          %493 = vst [vmem:[%s237 + $0x30] sm:$0xff] %v485
          %494 = vst [vmem:[%s237 + $0x38] sm:$0xff] %v486
        $region48: #{tpu_custom_call.1} parent=39 // pred_fallthru
          _
        %s495 = sand.u32 %s151, 1
        %s496 = scalar_lea.sflag [#allocation3], %s495
        %s497 = sand.u32 %s151, 1
        %s498 = smul.addr %s497, 64
        %s499 = scalar_lea.vmem [#allocation2], %s498
        // Predicated region
        $region49: #{tpu_custom_call.1} parent=39 // pred_check
          %p500 = pneg %p161
        $region50: #{tpu_custom_call.1} parent=39 // pred_check_branch
          %502 = sbr.rel (%p500) target = $region52
        $region51: #{tpu_custom_call.1} parent=39 // pred_region
          %504 = vsyncadd %s496, 0
          %s505 = smul.addr %s23, 8
          %s506 = scalar_lea.hbm %s5, %s505
          %s507 = sshll.u32 %s499, 4
          %s508 = int_to_ptr.vmem [resolvable:$true] %s507
          %s509 = sshll.u32 %s506, 4
          %s510 = int_to_ptr.hbm [resolvable:$true] %s509
          %515 = dma.vmem_to_hbm [thread:$0]  %s508, 1024, %s510, %s496, 128, 384, 8
        $region52: #{tpu_custom_call.1} parent=39 // pred_fallthru
          _
      $region40: #{tpu_custom_call.1} parent=5 // pred_fallthru
        _
      %p516 = scmp.le.s32.totalorder 2, %s14
      // Predicated region
      $region53: #{tpu_custom_call.1} parent=5 // pred_check
        %p517 = pneg %p516
      $region54: #{tpu_custom_call.1} parent=5 // pred_check_branch
        %519 = sbr.rel (%p517) target = $region56
      $region55: #{tpu_custom_call.1} parent=5 // pred_region
        %s520 = ssub.s32 %s14, 2
        // Predicated region
        $region57: #{tpu_custom_call.1} parent=55 // pred_check
          %p521 = pneg %p167
        $region58: #{tpu_custom_call.1} parent=55 // pred_check_branch
          %523 = sbr.rel (%p521) target = $region60
        $region59: #{tpu_custom_call.1} parent=55 // pred_region
          %s524 = sand.u32 %s152, 1
          %s525 = scalar_lea.sflag [#allocation3], %s524
          %s526 = sand.u32 %s152, 1
          %s527 = smul.addr %s526, 64
          %s528 = scalar_lea.vmem [#allocation2], %s527
          %530 = dma.done %s525, 1024
        $region60: #{tpu_custom_call.1} parent=55 // pred_fallthru
          _
      $region56: #{tpu_custom_call.1} parent=5 // pred_fallthru
        _
    $region6: #{tpu_custom_call.1} parent=1 // loop_footer
      %s18 = sadd.s32 1, %s14
    $region7: #{tpu_custom_call.1} parent=1 // loop_footer_branch
      %13 = sbr.rel target = $region3
    $region8: #{tpu_custom_call.1} parent=1 // loop_exit
      _
    %531 = vsyncpa [#allocation3], 1
    %s532 = scalar_lea.sflag [#allocation3], 1
    %533 = vsyncpa %s532, 1

</llo_original>
